<compile_context>
chip_gen: v5e
topology: v5e:2x2
jax: 0.10.0
libtpu: 0.0.40
codegen_flags: <defaults>
</compile_context>

<pallas_src>
import jax
import jax.numpy as jnp
from jax.experimental import pallas as pl
from jax.experimental.pallas import tpu as pltpu


# --------------------------------------------------------------------------- #
# Kernel
# --------------------------------------------------------------------------- #
def _mlp_kernel(x_ref, wgu_ref, wd_ref, o_ref, acc_ref):
    # x_ref:   [tm, H]
    # wgu_ref: [H, 2*ti]   (gate tile | up tile, concatenated on the lane axis)
    # wd_ref:  [ti, H]
    # o_ref:   [tm, H]
    # acc_ref: [tm, H] f32 accumulator, resident across the I-tile axis.
    j = pl.program_id(1)

    @pl.when(j == 0)
    def _():
        acc_ref[...] = jnp.zeros_like(acc_ref)

    x = x_ref[...]
    # Fused gate+up projection: one MXU matmul with N = 2*ti, f32 accumulation.
    gu = jnp.dot(x, wgu_ref[...], preferred_element_type=jnp.float32)  # [tm, 2*ti]
    ti = gu.shape[-1] // 2
    g = gu[:, :ti]          # ti is a multiple of 128 -> lane-aligned split
    u = gu[:, ti:]
    # SiLU(g) * u in f32 (sigmoid/exp runs on the EUP slot).
    h = (g * jax.nn.sigmoid(g)) * u
    acc_ref[...] += jnp.dot(h.astype(wd_ref.dtype), wd_ref[...],
                            preferred_element_type=jnp.float32)

    @pl.when(j == pl.num_programs(1) - 1)
    def _():
        o_ref[...] = acc_ref[...].astype(o_ref.dtype)


# --------------------------------------------------------------------------- #
# Sizing helpers
# --------------------------------------------------------------------------- #
def _round_up(x, m):
    return (x + m - 1) // m * m


def _device_vmem_bytes():
    """Physical VMEM per TensorCore; conservative default if the query fails."""
    try:
        return int(pltpu.get_tpu_info().vmem_capacity_bytes)
    except Exception:
        return 64 << 20  # assume v7x-sized VMEM when unknown


def _default_tiles(vmem_bytes):
    """(tm, ti) defaults per generation, chosen so production H (~8K) fits and
    arithmetic intensity (~tm flop/byte) clears the weight-streaming roofline."""
    if vmem_bytes >= (96 << 20):      # v5e / v6e: 128 MiB VMEM
        return 512, 256
    return 384, 256                   # v7x: 64 MiB VMEM per TC


def _pick_i_tile(inter, requested):
    """Return (ti, i_pad): a 128-aligned I tile and the zero-padded I extent."""
    i_pad = _round_up(inter, 128)
    ti = max(128, min(_round_up(requested, 128), i_pad))
    ti = (ti // 128) * 128
    while i_pad % ti != 0:
        ti -= 128
    return ti, i_pad


# --------------------------------------------------------------------------- #
# Load-time weight packing (run ONCE per parameter set, not per forward call)
# --------------------------------------------------------------------------- #
def pack_mlp_weights(w_gate, w_up, w_down, *, ti=None, dtype=None):
    """Pack PyTorch-layout weights (gate/up: [I, H], down: [H, I]) into
    streaming-friendly per-I-tile blocks:
        wgu: [nI, H, 2*ti]   (gate | up, concatenated on the lane axis)
        wd:  [nI, ti, H]
    I is zero-padded to a multiple of 128 so every tile is lane-aligned; the
    padded gate/up columns produce SiLU(0)*0 = 0 and the padded down rows are
    zero, so the padding is numerically inert."""
    inter, hidden = w_gate.shape
    if ti is None:
        _, ti = _default_tiles(_device_vmem_bytes())
    ti, i_pad = _pick_i_tile(inter, ti)

    if i_pad != inter:
        pad = i_pad - inter
        w_gate = jnp.pad(w_gate, ((0, pad), (0, 0)))
        w_up = jnp.pad(w_up, ((0, pad), (0, 0)))
        w_down = jnp.pad(w_down, ((0, 0), (0, pad)))
    if dtype is not None:
        w_gate = w_gate.astype(dtype)
        w_up = w_up.astype(dtype)
        w_down = w_down.astype(dtype)

    n_i = i_pad // ti
    wg = w_gate.T.reshape(hidden, n_i, ti)            # [H, nI, ti]
    wu = w_up.T.reshape(hidden, n_i, ti)              # [H, nI, ti]
    wgu = jnp.concatenate([wg, wu], axis=-1)          # [H, nI, 2*ti]
    wgu = jnp.transpose(wgu, (1, 0, 2))               # [nI, H, 2*ti]
    wd = w_down.T.reshape(n_i, ti, hidden)            # [nI, ti, H]
    return wgu, wd


# --------------------------------------------------------------------------- #
# Forward wrapper (hot path) — takes pre-packed weights
# --------------------------------------------------------------------------- #
def mlp_pallas_packed(x, wgu, wd, *, tm=None, out_dtype=None):
    """x: [..., H].  wgu/wd: outputs of `pack_mlp_weights`.  The MXU matmuls run
    in the packed-weight dtype (cast x accordingly); accumulation is f32."""
    orig_shape = x.shape
    hidden = orig_shape[-1]
    n_i, _, two_ti = wgu.shape
    ti = two_ti // 2

    if out_dtype is None:
        out_dtype = x.dtype
    compute_dtype = wgu.dtype
    x2 = x.reshape(-1, hidden).astype(compute_dtype)
    m = x2.shape[0]

    vmem_cap = _device_vmem_bytes()
    if tm is None:
        tm, _ = _default_tiles(vmem_cap)

    # Row tile: cap at (padded) token count, keep a multiple of 8 sublanes.
    tm_eff = _round_up(min(tm, _round_up(m, 8)), 8)
    itemsize = jnp.dtype(compute_dtype).itemsize

    def _vmem_estimate(tm_):
        return (2 * (tm_ * hidden            # x tile (double-buffered)
                     + hidden * 2 * ti       # fused gate+up weight tile
                     + ti * hidden           # down weight tile
                     + tm_ * hidden)         # output tile
                * itemsize
                + tm_ * hidden * 4)          # f32 accumulator scratch

    # Shrink the row tile if the estimate would not fit this device's VMEM.
    while _vmem_estimate(tm_eff) > int(vmem_cap * 0.85) and tm_eff > 64:
        tm_eff = _round_up(tm_eff // 2, 8)

    m_pad = _round_up(m, tm_eff)
    if m_pad != m:
        x2 = jnp.pad(x2, ((0, m_pad - m), (0, 0)))

    vmem_bytes = _vmem_estimate(tm_eff)
    vmem_limit = max(8 << 20,
                     min(int(vmem_bytes * 1.25) + (2 << 20),
                         int(vmem_cap * 0.9)))

    # TODO(synk): for decode-sized M on v7x (grid M axis == 1), split the I
    # reduction across the two TensorCores (two partial f32 accumulators + an
    # add outside the kernel) to use both cores of the chip.
    # TODO(synk): where VMEM headroom exists (v5e/v6e), pipeline_mode=
    # pl.Buffered(3) on the weight BlockSpecs can hide DMA jitter.
    out = pl.pallas_call(
        _mlp_kernel,
        out_shape=jax.ShapeDtypeStruct((m_pad, hidden), out_dtype),
        grid_spec=pltpu.PrefetchScalarGridSpec(
            num_scalar_prefetch=0,
            grid=(m_pad // tm_eff, n_i),
            in_specs=[
                pl.BlockSpec((tm_eff, hidden), lambda i, j: (i, 0)),           # x rows
                pl.BlockSpec((None, hidden, 2 * ti), lambda i, j: (j, 0, 0)),  # gate|up
                pl.BlockSpec((None, ti, hidden), lambda i, j: (j, 0, 0)),      # down
            ],
            out_specs=pl.BlockSpec((tm_eff, hidden), lambda i, j: (i, 0)),
            scratch_shapes=[pltpu.VMEM((tm_eff, hidden), jnp.float32)],
        ),
        compiler_params=pltpu.CompilerParams(
            dimension_semantics=("parallel", "arbitrary"),
            vmem_limit_bytes=vmem_limit,
        ),
    )(x2, wgu, wd)

    return out[:m].reshape(orig_shape[:-1] + (hidden,))


def mlp_pallas(x, w_gate, w_up, w_down, *, tm=None, ti=None, compute_dtype=None):
    """Convenience wrapper: packs weights then calls the kernel.  In a real
    model call `pack_mlp_weights` once at parameter-load time and use
    `mlp_pallas_packed` in the forward path."""
    wgu, wd = pack_mlp_weights(w_gate, w_up, w_down, ti=ti, dtype=compute_dtype)
    return mlp_pallas_packed(x, wgu, wd, tm=tm, out_dtype=x.dtype)


def mlp_reference(x, w_gate, w_up, w_down):
    g = x @ w_gate.T
    u = x @ w_up.T
    h = (g * jax.nn.sigmoid(g)) * u
    return h @ w_down.T


if __name__ == "__main__":
    # Small config consistent with the module: hidden_size=32, intermediate_size=64.
    batch, seq, hidden, inter = 2, 8, 32, 64

    key = jax.random.PRNGKey(0)
    kx, kg, ku, kd = jax.random.split(key, 4)
    x = jax.random.normal(kx, (batch, seq, hidden), dtype=jnp.float32)
    # PyTorch nn.Linear layout [out_features, in_features], no bias.
    w_gate = jax.random.normal(kg, (inter, hidden), dtype=jnp.float32) * 0.05
    w_up = jax.random.normal(ku, (inter, hidden), dtype=jnp.float32) * 0.05
    w_down = jax.random.normal(kd, (hidden, inter), dtype=jnp.float32) * 0.05

    ref = mlp_reference(x, w_gate, w_up, w_down)

    # f32 path: weights packed once (load time), tight tolerance.
    wgu32, wd32 = pack_mlp_weights(w_gate, w_up, w_down, dtype=jnp.float32)
    out32 = jax.block_until_ready(mlp_pallas_packed(x, wgu32, wd32))
    assert out32.shape == (batch, seq, hidden)
    assert jnp.allclose(out32, ref, atol=1e-4, rtol=1e-4), "f32 mismatch vs reference"

    # bf16 MXU path (production configuration): looser tolerance vs f32 reference.
    wgu16, wd16 = pack_mlp_weights(w_gate, w_up, w_down, dtype=jnp.bfloat16)
    out16 = jax.block_until_ready(
        mlp_pallas_packed(x, wgu16, wd16, out_dtype=jnp.float32))
    assert out16.shape == (batch, seq, hidden)
    assert jnp.allclose(out16, ref, atol=5e-2, rtol=5e-2), "bf16 mismatch vs reference"

    print("KERNEL_OK")
</pallas_src>

<mosaic_0001>
module attributes {stable_mosaic.version = 11 : i64} {
  func.func @_mlp_kernel(%arg0: i32, %arg1: i32, %arg2: memref<16x32xf32, #tpu.memory_space<vmem>>, %arg3: memref<1x32x256xf32, #tpu.memory_space<vmem>>, %arg4: memref<1x128x32xf32, #tpu.memory_space<vmem>>, %arg5: memref<16x32xf32, #tpu.memory_space<vmem>>, %arg6: memref<16x32xf32, #tpu.memory_space<vmem>>) attributes {dimension_semantics = [#tpu.dimension_semantics<parallel>, #tpu.dimension_semantics<arbitrary>], iteration_bounds = array<i64: 1, 1>, scalar_prefetch = 0 : i64, scratch_operands = 1 : i64, tpu.core_type = #tpu.core_type<tc>, window_params = [{transform_indices = @transform_0, window_bounds = array<i64: 16, 32>}, {transform_indices = @transform_1, window_bounds = array<i64: 1, 32, 256>}, {transform_indices = @transform_2, window_bounds = array<i64: 1, 128, 32>}, {transform_indices = @transform_3, window_bounds = array<i64: 16, 32>}]} {
    %c0_i32 = arith.constant 0 : i32
    %0 = arith.cmpi eq, %arg1, %c0_i32 : i32
    %1 = arith.extui %0 : i1 to i32
    %c0_i32_0 = arith.constant 0 : i32
    %2 = arith.cmpi ne, %1, %c0_i32_0 : i32
    scf.if %2 {
      %cst_16 = arith.constant 0.000000e+00 : f32
      %25 = vector.broadcast %cst_16 : f32 to vector<16x32xf32>
      %c0_17 = arith.constant 0 : index
      %c0_18 = arith.constant 0 : index
      %26 = vector.load %arg6[%c0_17, %c0_18] : memref<16x32xf32, #tpu.memory_space<vmem>>, vector<16x32xf32>
      tpu.vector_store %arg6[%c0_17, %c0_18], %25 {strides = array<i32>} : memref<16x32xf32, #tpu.memory_space<vmem>>, vector<16x32xf32>,
    } else {
    }
    %c0 = arith.constant 0 : index
    %c0_1 = arith.constant 0 : index
    %3 = vector.load %arg2[%c0, %c0_1] : memref<16x32xf32, #tpu.memory_space<vmem>>, vector<16x32xf32>
    %c0_2 = arith.constant 0 : index
    %c0_3 = arith.constant 0 : index
    %c0_4 = arith.constant 0 : index
    %4 = vector.load %arg3[%c0_2, %c0_3, %c0_4] : memref<1x32x256xf32, #tpu.memory_space<vmem>>, vector<1x32x256xf32>
    %5 = vector.shape_cast %4 : vector<1x32x256xf32> to vector<32x256xf32>
    %cst = arith.constant dense<0.000000e+00> : vector<16x256xf32>
    %6 = tpu.matmul %3, %5, %cst {dimension_numbers = #tpu.dot_dimension_numbers<[1], [0], [0], [1], [0, 0, 1, 1], [], []>} : vector<16x32xf32>, vector<32x256xf32>, vector<16x256xf32> -> vector<16x256xf32>
    %7 = vector.extract_strided_slice %6 {offsets = [0, 0], sizes = [16, 128], strides = [1, 1]} : vector<16x256xf32> to vector<16x128xf32>
    %8 = vector.extract_strided_slice %6 {offsets = [0, 128], sizes = [16, 128], strides = [1, 1]} : vector<16x256xf32> to vector<16x128xf32>
    %9 = arith.negf %7 : vector<16x128xf32>
    %10 = math.exp %9 : vector<16x128xf32>
    %cst_5 = arith.constant 1.000000e+00 : f32
    %11 = vector.broadcast %cst_5 : f32 to vector<16x128xf32>
    %12 = arith.addf %11, %10 : vector<16x128xf32>
    %13 = arith.divf %11, %12 : vector<16x128xf32>
    %14 = arith.mulf %7, %13 : vector<16x128xf32>
    %15 = arith.mulf %14, %8 : vector<16x128xf32>
    %c0_6 = arith.constant 0 : index
    %c0_7 = arith.constant 0 : index
    %16 = vector.load %arg6[%c0_6, %c0_7] : memref<16x32xf32, #tpu.memory_space<vmem>>, vector<16x32xf32>
    %c0_8 = arith.constant 0 : index
    %c0_9 = arith.constant 0 : index
    %c0_10 = arith.constant 0 : index
    %17 = vector.load %arg4[%c0_8, %c0_9, %c0_10] : memref<1x128x32xf32, #tpu.memory_space<vmem>>, vector<1x128x32xf32>
    %18 = vector.shape_cast %17 : vector<1x128x32xf32> to vector<128x32xf32>
    %cst_11 = arith.constant dense<0.000000e+00> : vector<16x32xf32>
    %19 = tpu.matmul %15, %18, %cst_11 {dimension_numbers = #tpu.dot_dimension_numbers<[1], [0], [0], [1], [0, 0, 1, 1], [], []>} : vector<16x128xf32>, vector<128x32xf32>, vector<16x32xf32> -> vector<16x32xf32>
    %20 = arith.addf %16, %19 : vector<16x32xf32>
    %c0_12 = arith.constant 0 : index
    %c0_13 = arith.constant 0 : index
    %21 = vector.load %arg6[%c0_12, %c0_13] : memref<16x32xf32, #tpu.memory_space<vmem>>, vector<16x32xf32>
    tpu.vector_store %arg6[%c0_12, %c0_13], %20 {strides = array<i32>} : memref<16x32xf32, #tpu.memory_space<vmem>>, vector<16x32xf32>,
    %c0_i32_14 = arith.constant 0 : i32
    %22 = arith.cmpi eq, %arg1, %c0_i32_14 : i32
    %23 = arith.extui %22 : i1 to i32
    %c0_i32_15 = arith.constant 0 : i32
    %24 = arith.cmpi ne, %23, %c0_i32_15 : i32
    scf.if %24 {
      %c0_16 = arith.constant 0 : index
      %c0_17 = arith.constant 0 : index
      %25 = vector.load %arg6[%c0_16, %c0_17] : memref<16x32xf32, #tpu.memory_space<vmem>>, vector<16x32xf32>
      %c0_18 = arith.constant 0 : index
      %c0_19 = arith.constant 0 : index
      %26 = vector.load %arg5[%c0_18, %c0_19] : memref<16x32xf32, #tpu.memory_space<vmem>>, vector<16x32xf32>
      tpu.vector_store %arg5[%c0_18, %c0_19], %25 {strides = array<i32>} : memref<16x32xf32, #tpu.memory_space<vmem>>, vector<16x32xf32>,
    } else {
    }
    return
  }
  func.func @transform_0(%arg0: i32, %arg1: i32) -> (i32, i32) {
    %c0_i32 = arith.constant 0 : i32
    %c0_i32_0 = arith.constant 0 : i32
    return %arg0, %c0_i32 : i32, i32
  }
  func.func @transform_1(%arg0: i32, %arg1: i32) -> (i32, i32, i32) {
    %c0_i32 = arith.constant 0 : i32
    %c0_i32_0 = arith.constant 0 : i32
    %c0_i32_1 = arith.constant 0 : i32
    return %arg1, %c0_i32, %c0_i32_0 : i32, i32, i32
  }
  func.func @transform_2(%arg0: i32, %arg1: i32) -> (i32, i32, i32) {
    %c0_i32 = arith.constant 0 : i32
    %c0_i32_0 = arith.constant 0 : i32
    %c0_i32_1 = arith.constant 0 : i32
    return %arg1, %c0_i32, %c0_i32_0 : i32, i32, i32
  }
  func.func @transform_3(%arg0: i32, %arg1: i32) -> (i32, i32) {
    %c0_i32 = arith.constant 0 : i32
    %c0_i32_0 = arith.constant 0 : i32
    return %arg0, %c0_i32 : i32, i32
  }
}

</mosaic_0001>

<llo_original>
// kernel: tpu_custom_call.1
$region0: #{tpu_custom_call.1}
  #allocation0 [shape = 'u32[]', space=smem, size = 0x4, offset = 0x4, fixed_abs, tag = 'smem constant byte address 0x4 - core index']
  #allocation1 [shape = 'u32[72,128]{1,0:T(1,128)}', space=vmem, size = 0x9000, scoped, tag = 'internal scratch']
  #allocation2 [shape = 'f32[16,32]{1,0:T(8,128)}', space=vmem, size = 0x2000, scoped, tag = 'scratch operand']
  %s0 = inlined_call_operand.vmem [shape: f32[16,32], index: 0, kind: input, shape index: {}]
  %s1 = inlined_call_operand.vmem [shape: f32[1,32,256], index: 1, kind: input, shape index: {}]
  %s2 = inlined_call_operand.vmem [shape: f32[1,128,32], index: 2, kind: input, shape index: {}]
  %s3 = inlined_call_operand.hbm [shape: f32[16,32], index: 3, kind: output, shape index: {}]
  %s4 = sld [smem:[#allocation0]]
  $region30: #{tpu_custom_call.1} parent=0
    _
  %s6 = ssub.s32 1, %s4
  %s7 = scalar_select 0, %s6, %s4
  $region1: #{tpu_custom_call.1} parent=0
    #allocation3 [shape = 'u8[8192]{0}', space=vmem, size = 0x2000, scoped, tag = 'output window, operand 0, single buffered']
    #allocation4 [shape = 's32[1]{0}', space=sflag, size = 0x4, scoped, tag = 'scoped memory for tpu_custom_call.1']
    %8 = vsyncpa [#allocation4], 0
    // Predicated region
    $region2: #{tpu_custom_call.1} parent=1 // pred_check
      _
    $region3: #{tpu_custom_call.1} parent=1 // pred_check_branch
      %10 = sbr.rel (0) target = $region5
    $region4: #{tpu_custom_call.1} parent=1 // pred_region
      _
    $region5: #{tpu_custom_call.1} parent=1 // pred_fallthru
      _
    // Predicated region
    $region6: #{tpu_custom_call.1} parent=1 // pred_check
      _
    $region7: #{tpu_custom_call.1} parent=1 // pred_check_branch
      %12 = sbr.rel (0) target = $region9
    $region8: #{tpu_custom_call.1} parent=1 // pred_region
      _
    $region9: #{tpu_custom_call.1} parent=1 // pred_fallthru
      _
    // Predicated region
    $region10: #{tpu_custom_call.1} parent=1 // pred_check
      _
    $region11: #{tpu_custom_call.1} parent=1 // pred_check_branch
      %14 = sbr.rel (0) target = $region13
    $region12: #{tpu_custom_call.1} parent=1 // pred_region
      _
    $region13: #{tpu_custom_call.1} parent=1 // pred_fallthru
      _
    %p15 = scmp.eq.s32.totalorder 0, 0
    // Predicated region
    $region14: #{tpu_custom_call.1} parent=1 // pred_check
      %p16 = pneg %p15
    $region15: #{tpu_custom_call.1} parent=1 // pred_check_branch
      %18 = sbr.rel (%p16) target = $region17
    $region16: #{tpu_custom_call.1} parent=1 // pred_region
      %vm19 = vcmask 261120
      %20 = vst.msk [vmem:[#allocation2] sm:$0xff] %vm19, 0.0
      %21 = vst.msk [vmem:[#allocation2 + $0x8] sm:$0xff] %vm19, 0.0
    $region17: #{tpu_custom_call.1} parent=1 // pred_fallthru
      _
    %v22 = vld [vmem:[%s0] sm:$0xff]
    %v23 = vld [vmem:[%s0 + $0x8] sm:$0xff]
    %v24 = vld [vmem:[%s1] sm:$0xff]
    %v25 = vld [vmem:[%s1 + $0x8] sm:$0xff]
    %v26 = vld [vmem:[%s1 + $0x10] sm:$0xff]
    %v27 = vld [vmem:[%s1 + $0x18] sm:$0xff]
    %v28 = vld [vmem:[%s1 + $0x20] sm:$0xff]
    %v29 = vld [vmem:[%s1 + $0x28] sm:$0xff]
    %v30 = vld [vmem:[%s1 + $0x30] sm:$0xff]
    %v31 = vld [vmem:[%s1 + $0x38] sm:$0xff]
    %vm32 = vcmask 261120
    %v34 = vsel %vm32, %v22, 0
    %v37 = vsel %vm32, %v23, 0
    %39 = vmatpush.msra.mxu0 0.0
    %40 = vmatpush.msra.mxu0 0.0
    %41 = vmatpush.msra.mxu0 0.0
    %42 = vmatpush.msra.mxu0 0.0
    %43 = vmatpush.msra.mxu0 0.0
    %44 = vmatpush.msra.mxu0 0.0
    %45 = vmatpush.msra.mxu0 0.0
    %46 = vmatpush.msra.mxu0 0.0
    %47 = vmatpush.msra.mxu0 0.0
    %48 = vmatpush.msra.mxu0 0.0
    %49 = vmatpush.msra.mxu0 0.0
    %50 = vmatpush.msra.mxu0 0.0
    %51 = vmatpush.msra.mxu0 %v30
    %52 = vmatpush.msra.mxu0 %v28
    %53 = vmatpush.msra.mxu0 %v26
    %54 = vmatpush.msra.mxu0 %v24
    %55 = vmatmul.f32.gmra.mxu0 %v34
    %v56 = vpop.f32.mrf.mxu0
    %v57 = vadd.f32 0.0, %v56
    %58 = vmatmul.f32.gmra.mxu0 %v37
    %v59 = vpop.f32.mrf.mxu0
    %v60 = vadd.f32 0.0, %v59
    %61 = vdwg.mxu0
    %62 = vmatpush.msra.mxu0 0.0
    %63 = vmatpush.msra.mxu0 0.0
    %64 = vmatpush.msra.mxu0 0.0
    %65 = vmatpush.msra.mxu0 0.0
    %66 = vmatpush.msra.mxu0 0.0
    %67 = vmatpush.msra.mxu0 0.0
    %68 = vmatpush.msra.mxu0 0.0
    %69 = vmatpush.msra.mxu0 0.0
    %70 = vmatpush.msra.mxu0 0.0
    %71 = vmatpush.msra.mxu0 0.0
    %72 = vmatpush.msra.mxu0 0.0
    %73 = vmatpush.msra.mxu0 0.0
    %74 = vmatpush.msra.mxu0 %v31
    %75 = vmatpush.msra.mxu0 %v29
    %76 = vmatpush.msra.mxu0 %v27
    %77 = vmatpush.msra.mxu0 %v25
    %78 = vmatmul.f32.gmra.mxu0 %v34
    %v79 = vpop.f32.mrf.mxu0
    %v80 = vadd.f32 0.0, %v79
    %81 = vmatmul.f32.gmra.mxu0 %v37
    %v82 = vpop.f32.mrf.mxu0
    %v83 = vadd.f32 0.0, %v82
    %84 = vdwg.mxu0
    %v85 = vxor.u32 %v57, 2147483648
    %v86 = vxor.u32 %v60, 2147483648
    %v87 = vmul.f32 %v85, 1.442695
    %v88 = vpow.pop %v87
    %v89 = vmul.f32 %v86, 1.442695
    %v90 = vpow.pop %v89
    %v91 = vadd.f32 %v88, 1.0
    %v92 = vadd.f32 %v90, 1.0
    %v93 = vrcp.pop %v91
    %v94 = vmul.f32 %v91, %v93
    %v95 = vsub.f32 1.0, %v94
    %v96 = vmul.f32 %v93, %v95
    %v97 = vadd.f32 %v93, %v96
    %vm98 = vweird.f32 %v91
    %vm99 = vweird.f32 %v93
    %vm100 = vmor %vm98, %vm99
    %v101 = vsel %vm100, %v93, %v97
    %v102 = vand.u32 2147483647, %v91
    %vm103 = vcmp.eq.f32.partialorder %v102, 8.507059e+37
    %v104 = vand.u32 %v91, 2147483648
    %v105 = vor.u32 1.1754944e-38, %v104
    %v106 = vsel %vm103, %v105, %v101
    %v107 = vmul.f32 1.0, %v106
    %v108 = vrcp.pop %v92
    %v109 = vmul.f32 %v92, %v108
    %v110 = vsub.f32 1.0, %v109
    %v111 = vmul.f32 %v108, %v110
    %v112 = vadd.f32 %v108, %v111
    %vm113 = vweird.f32 %v92
    %vm114 = vweird.f32 %v108
    %vm115 = vmor %vm113, %vm114
    %v116 = vsel %vm115, %v108, %v112
    %v117 = vand.u32 2147483647, %v92
    %vm118 = vcmp.eq.f32.partialorder %v117, 8.507059e+37
    %v119 = vand.u32 %v92, 2147483648
    %v120 = vor.u32 1.1754944e-38, %v119
    %v121 = vsel %vm118, %v120, %v116
    %v122 = vmul.f32 1.0, %v121
    %v123 = vmul.f32 %v57, %v107
    %v124 = vmul.f32 %v60, %v122
    %v125 = vmul.f32 %v123, %v80
    %v126 = vmul.f32 %v124, %v83
    %v127 = vld [vmem:[#allocation2] sm:$0xff]
    %v128 = vld [vmem:[#allocation2 + $0x8] sm:$0xff]
    %v129 = vld [vmem:[%s2] sm:$0xff]
    %v130 = vld [vmem:[%s2 + $0x8] sm:$0xff]
    %v131 = vld [vmem:[%s2 + $0x10] sm:$0xff]
    %v132 = vld [vmem:[%s2 + $0x18] sm:$0xff]
    %v133 = vld [vmem:[%s2 + $0x20] sm:$0xff]
    %v134 = vld [vmem:[%s2 + $0x28] sm:$0xff]
    %v135 = vld [vmem:[%s2 + $0x30] sm:$0xff]
    %v136 = vld [vmem:[%s2 + $0x38] sm:$0xff]
    %v137 = vld [vmem:[%s2 + $0x40] sm:$0xff]
    %v138 = vld [vmem:[%s2 + $0x48] sm:$0xff]
    %v139 = vld [vmem:[%s2 + $0x50] sm:$0xff]
    %v140 = vld [vmem:[%s2 + $0x58] sm:$0xff]
    %v141 = vld [vmem:[%s2 + $0x60] sm:$0xff]
    %v142 = vld [vmem:[%s2 + $0x68] sm:$0xff]
    %v143 = vld [vmem:[%s2 + $0x70] sm:$0xff]
    %v144 = vld [vmem:[%s2 + $0x78] sm:$0xff]
    %145 = vmatpush.msra.mxu0 %v144
    %146 = vmatpush.msra.mxu0 %v143
    %147 = vmatpush.msra.mxu0 %v142
    %148 = vmatpush.msra.mxu0 %v141
    %149 = vmatpush.msra.mxu0 %v140
    %150 = vmatpush.msra.mxu0 %v139
    %151 = vmatpush.msra.mxu0 %v138
    %152 = vmatpush.msra.mxu0 %v137
    %153 = vmatpush.msra.mxu0 %v136
    %154 = vmatpush.msra.mxu0 %v135
    %155 = vmatpush.msra.mxu0 %v134
    %156 = vmatpush.msra.mxu0 %v133
    %157 = vmatpush.msra.mxu0 %v132
    %158 = vmatpush.msra.mxu0 %v131
    %159 = vmatpush.msra.mxu0 %v130
    %160 = vmatpush.msra.mxu0 %v129
    %161 = vmatmul.f32.gmra.mxu0 %v125
    %v162 = vpop.f32.mrf.mxu0
    %v163 = vadd.f32 0.0, %v162
    %164 = vmatmul.f32.gmra.mxu0 %v126
    %v165 = vpop.f32.mrf.mxu0
    %v166 = vadd.f32 0.0, %v165
    %167 = vdwg.mxu0
    %v168 = vadd.f32 %v127, %v163
    %v169 = vadd.f32 %v128, %v166
    %170 = vst.msk [vmem:[#allocation2] sm:$0xff] %vm32, %v168
    %171 = vst.msk [vmem:[#allocation2 + $0x8] sm:$0xff] %vm32, %v169
    // Predicated region
    $region18: #{tpu_custom_call.1} parent=1 // pred_check
      %p172 = pneg %p15
    $region19: #{tpu_custom_call.1} parent=1 // pred_check_branch
      %174 = sbr.rel (%p172) target = $region21
    $region20: #{tpu_custom_call.1} parent=1 // pred_region
      %v175 = vld [vmem:[#allocation2] sm:$0xff]
      %v176 = vld [vmem:[#allocation2 + $0x8] sm:$0xff]
      %177 = vst.msk [vmem:[#allocation3] sm:$0xff] %vm32, %v175
      %178 = vst.msk [vmem:[#allocation3 + $0x8] sm:$0xff] %vm32, %v176
    $region21: #{tpu_custom_call.1} parent=1 // pred_fallthru
      _
    // Predicated region
    $region22: #{tpu_custom_call.1} parent=1 // pred_check
      _
    $region23: #{tpu_custom_call.1} parent=1 // pred_check_branch
      %180 = sbr.rel (0) target = $region25
    $region24: #{tpu_custom_call.1} parent=1 // pred_region
      %182 = vsyncadd [#allocation4], 0
      %s183 = sshll.u32 [#allocation3], 4
      %s184 = int_to_ptr.vmem [resolvable:$true] %s183
      %s185 = sshll.u32 %s3, 4
      %s186 = int_to_ptr.hbm [resolvable:$true] %s185
      %191 = dma.vmem_to_hbm [thread:$0]  %s184, 256, %s186, [#allocation4], 128, 128, 8
    $region25: #{tpu_custom_call.1} parent=1 // pred_fallthru
      _
    // Predicated region
    $region26: #{tpu_custom_call.1} parent=1 // pred_check
      _
    $region27: #{tpu_custom_call.1} parent=1 // pred_check_branch
      %193 = sbr.rel (0) target = $region29
    $region28: #{tpu_custom_call.1} parent=1 // pred_region
      %195 = dma.done [#allocation4], 256
    $region29: #{tpu_custom_call.1} parent=1 // pred_fallthru
      _
    %196 = vsyncpa [#allocation4], 1

</llo_original>
